<compile_context>
chip_gen: v6e
topology: v6e:2x2x1
jax: 0.10.0
libtpu: 0.0.40
codegen_flags: <defaults>
</compile_context>

<pallas_src>
import functools

import jax
import jax.numpy as jnp
from jax.experimental import pallas as pl
from jax.experimental.pallas import tpu as pltpu

_LANE = 128
_SUBLANE = 8

# VMEM-residency ceiling for the packed parameter table.  The default BlockSpec
# pipeline double-buffers the input, so budget ~2x table bytes against v7x's
# 32 MiB default scoped VMEM (64 MiB physical); v5e/v6e (128 MiB) have ample
# headroom either way.
_RESIDENT_TABLE_BYTES_MAX = 8 * 1024 * 1024


def pack_param_table(param_stack: jax.Array) -> jax.Array:
    """One-time (init-path) repack of the Eps parameter stack into a lane-dense
    (num_ids, flat_p) table, flat_p = n_records * n_eps padded up to 128 lanes.

    Do this once when the parameters are built, NOT per forward call — under
    jit the pad would otherwise read+write the whole table every step.
    """
    num_ids, n_records, n_eps = param_stack.shape
    flat = n_records * n_eps
    pad = (-flat) % _LANE
    p2d = param_stack.reshape(num_ids, flat)
    if pad:
        p2d = jnp.pad(p2d, ((0, 0), (0, pad)))
    return p2d


def _eps_gather_resident_kernel(ids_ref, table_ref, o_ref, *, tb):
    # ids_ref:   SMEM (batch_padded,) int32 subject ids (scalar-prefetched)
    # table_ref: VMEM (num_ids, 1, flat_p) full lane-dense parameter table,
    #            resident across all grid steps (constant block index -> one DMA)
    # o_ref:     VMEM (tb, flat_p) output block for this grid step
    base = pl.program_id(0) * tb
    # Dynamic indexing along the leading (non-tiled) axis of the VMEM table is
    # cheap; tb is a small static constant so this fully unrolls.
    rows = [table_ref[ids_ref[base + i]] for i in range(tb)]  # each (1, flat_p)
    # One dense (tb, flat_p) block -> full-lane (and, for tb=8, full-sublane)
    # unmasked store.
    o_ref[...] = jnp.concatenate(rows, axis=0)


def _eps_copy_streamed_kernel(ids_ref, p_ref, o_ref):
    # Streamed fallback: ids drive the input index_map; body is a plain copy.
    del ids_ref
    o_ref[...] = p_ref[...]


@functools.partial(jax.jit, static_argnames=("n_records", "n_eps", "force_streamed"))
def eps_gather_packed(table: jax.Array, ids: jax.Array, *, n_records: int,
                      n_eps: int, force_streamed: bool = False) -> jax.Array:
    """Batched Eps.forward(): returns param_stack[ids] -> (B, n_records, n_eps).

    `table` is the pre-packed lane-dense (num_ids, flat_p) table from
    pack_param_table().
    """
    num_ids, flat_p = table.shape
    batch = ids.shape[0]
    flat = n_records * n_eps
    dtype_size = jnp.dtype(table.dtype).itemsize
    table_bytes = num_ids * flat_p * dtype_size

    # Clamp on device so a bad id can never drive an out-of-range read.
    # TODO(synk): add a debug-mode pl.debug_check / host-side assert if invalid
    # subject ids should fail loudly instead of being silently clamped.
    ids = jnp.clip(ids.astype(jnp.int32), 0, num_ids - 1)

    if (not force_streamed) and table_bytes <= _RESIDENT_TABLE_BYTES_MAX:
        # ------- table-resident path: one table DMA + in-body row gather -----
        tb = _SUBLANE if batch >= _SUBLANE else batch  # block == full dim if batch < 8
        pad_b = (-batch) % tb
        batch_p = batch + pad_b
        if pad_b:
            ids = jnp.concatenate([ids, jnp.zeros((pad_b,), jnp.int32)])
        grid_len = batch_p // tb
        sem = "parallel" if grid_len >= 4 else "arbitrary"

        table3d = table.reshape(num_ids, 1, flat_p)  # leading axis = gather axis

        out = pl.pallas_call(
            functools.partial(_eps_gather_resident_kernel, tb=tb),
            out_shape=jax.ShapeDtypeStruct((batch_p, flat_p), table.dtype),
            grid_spec=pltpu.PrefetchScalarGridSpec(
                num_scalar_prefetch=1,
                grid=(grid_len,),
                in_specs=[
                    # Full table, constant block index -> stays VMEM-resident
                    # across every grid step (no per-id HBM re-fetches).
                    pl.BlockSpec((num_ids, 1, flat_p),
                                 lambda b, ids_ref: (0, 0, 0)),
                ],
                out_specs=pl.BlockSpec((tb, flat_p),
                                       lambda b, ids_ref: (b, 0)),
            ),
            compiler_params=pltpu.CompilerParams(
                dimension_semantics=(sem,),
            ),
            cost_estimate=pl.CostEstimate(
                flops=0,
                transcendentals=0,
                bytes_accessed=table_bytes + batch_p * flat_p * dtype_size,
            ),
        )(ids, table3d)
        if pad_b:
            out = out[:batch]
    else:
        # ------- streamed fallback (table too big for VMEM residency) --------
        # One lane-dense (1, 1, flat_p) block per id; BlockSpec double-
        # buffering pipelines the per-id HBM reads.
        p3d = table.reshape(num_ids, 1, flat_p)
        out = pl.pallas_call(
            _eps_copy_streamed_kernel,
            out_shape=jax.ShapeDtypeStruct((batch, 1, flat_p), table.dtype),
            grid_spec=pltpu.PrefetchScalarGridSpec(
                num_scalar_prefetch=1,
                grid=(batch,),
                in_specs=[
                    pl.BlockSpec((1, 1, flat_p),
                                 lambda b, ids_ref: (ids_ref[b], 0, 0)),
                ],
                out_specs=pl.BlockSpec((1, 1, flat_p),
                                       lambda b, ids_ref: (b, 0, 0)),
            ),
            compiler_params=pltpu.CompilerParams(
                dimension_semantics=(("parallel",) if batch >= 4 else ("arbitrary",)),
            ),
            cost_estimate=pl.CostEstimate(
                flops=0,
                transcendentals=0,
                bytes_accessed=2 * batch * flat_p * dtype_size,
            ),
        )(ids, p3d).reshape(batch, flat_p)

    if flat_p == flat:
        # pad == 0: pure reshape, no extra copy.
        return out.reshape(batch, n_records, n_eps)
    # TODO(synk): when flat_p > flat, prefer handing the padded (B, flat_p)
    # slab to the consumer and slicing at fusion time; the slice below is an
    # extra full-output copy kept only to match Eps.forward()'s exact shape.
    return out[:, :flat].reshape(batch, n_records, n_eps)


def eps_forward(table: jax.Array, eps_id, *, n_records: int, n_eps: int) -> jax.Array:
    """Single-id equivalent of Eps.forward(): parameter_values[str(id)]."""
    ids = jnp.asarray(eps_id, dtype=jnp.int32).reshape(1)
    return eps_gather_packed(table, ids, n_records=n_records, n_eps=n_eps)[0]


if __name__ == "__main__":
    # Deterministic synthetic "parameter_values": 4 subject ids, each with an
    # epsilon parameter of shape (n_records=16, n_eps=8)  -> flat = 128 lanes.
    key = jax.random.PRNGKey(0)
    num_ids, n_records, n_eps = 4, 16, 8
    param_stack = jax.random.normal(
        key, (num_ids, n_records, n_eps), dtype=jnp.float32
    )

    # Init-time lane-dense repack (hoisted out of the jitted hot path).
    table = pack_param_table(param_stack)

    # Single-id lookup (the module's self.id at call time).
    out = jax.block_until_ready(
        eps_forward(table, 2, n_records=n_records, n_eps=n_eps))
    assert out.shape == (n_records, n_eps)
    assert out.dtype == jnp.float32
    assert bool(jnp.array_equal(out, param_stack[2]))

    # Batched lookup, batch multiple of 8 -> (8,128)-dense blocks, no padding.
    ids8 = jnp.asarray([2, 0, 3, 1, 2, 1, 0, 3], dtype=jnp.int32)
    out8 = jax.block_until_ready(
        eps_gather_packed(table, ids8, n_records=n_records, n_eps=n_eps))
    assert out8.shape == (ids8.shape[0], n_records, n_eps)
    assert bool(jnp.array_equal(out8, param_stack[ids8]))

    # Batched lookup that exercises batch padding (12 -> 16, grid of 2 steps).
    ids12 = jnp.asarray([0, 1, 2, 3] * 3, dtype=jnp.int32)
    out12 = jax.block_until_ready(
        eps_gather_packed(table, ids12, n_records=n_records, n_eps=n_eps))
    assert out12.shape == (12, n_records, n_eps)
    assert bool(jnp.array_equal(out12, param_stack[ids12]))

    # Streamed fallback path (used when the table exceeds the VMEM residency
    # ceiling, e.g. very large tables on v7x) — exercised explicitly here.
    out_s = jax.block_until_ready(
        eps_gather_packed(table, ids8, n_records=n_records, n_eps=n_eps,
                          force_streamed=True))
    assert bool(jnp.array_equal(out_s, param_stack[ids8]))

    # TODO(synk): Eps in torchpm also carries dict bookkeeping (registering
    # per-id nn.Parameters keyed by str(id)); that is host-side Python state,
    # not kernel work.
    print("KERNEL_OK")
</pallas_src>

<mosaic_0001>
module attributes {stable_mosaic.version = 11 : i64} {
  func.func @_eps_gather_resident_kernel(%arg0: i32, %arg1: memref<1xi32, #tpu.memory_space<smem>>, %arg2: memref<4x1x128xf32, #tpu.memory_space<vmem>>, %arg3: memref<1x128xf32, #tpu.memory_space<vmem>>) attributes {dimension_semantics = [#tpu.dimension_semantics<arbitrary>], iteration_bounds = array<i64: 1>, scalar_prefetch = 1 : i64, scratch_operands = 0 : i64, tpu.core_type = #tpu.core_type<tc>, window_params = [{pipeline_mode = #tpu.pipeline_mode<synchronous>, transform_indices = @transform_0, window_bounds = array<i64: 4, 1, 128>}, {transform_indices = @transform_1, window_bounds = array<i64: 1, 128>}]} {
    %c1_i32 = arith.constant 1 : i32
    %0 = arith.muli %arg0, %c1_i32 : i32
    %c0_i32 = arith.constant 0 : i32
    %1 = arith.addi %0, %c0_i32 : i32
    %2 = arith.index_cast %1 : i32 to index
    %3 = memref.load %arg1[%2] : memref<1xi32, #tpu.memory_space<smem>>
    %4 = arith.index_cast %3 : i32 to index
    %c0 = arith.constant 0 : index
    %c0_0 = arith.constant 0 : index
    %5 = vector.load %arg2[%4, %c0, %c0_0] : memref<4x1x128xf32, #tpu.memory_space<vmem>>, vector<1x1x128xf32>
    %6 = vector.shape_cast %5 : vector<1x1x128xf32> to vector<1x128xf32>
    %c0_1 = arith.constant 0 : index
    %c0_2 = arith.constant 0 : index
    %7 = vector.load %arg3[%c0_1, %c0_2] : memref<1x128xf32, #tpu.memory_space<vmem>>, vector<1x128xf32>
    tpu.vector_store %arg3[%c0_1, %c0_2], %6 {strides = array<i32>} : memref<1x128xf32, #tpu.memory_space<vmem>>, vector<1x128xf32>,
    return
  }
  func.func @transform_0(%arg0: i32, %arg1: memref<1xi32, #tpu.memory_space<smem>>) -> (i32, i32, i32) {
    %c0_i32 = arith.constant 0 : i32
    %c0_i32_0 = arith.constant 0 : i32
    %c0_i32_1 = arith.constant 0 : i32
    %c0_i32_2 = arith.constant 0 : i32
    return %c0_i32, %c0_i32_0, %c0_i32_1 : i32, i32, i32
  }
  func.func @transform_1(%arg0: i32, %arg1: memref<1xi32, #tpu.memory_space<smem>>) -> (i32, i32) {
    %c0_i32 = arith.constant 0 : i32
    %c0_i32_0 = arith.constant 0 : i32
    return %arg0, %c0_i32 : i32, i32
  }
}

</mosaic_0001>

<llo_original>
// kernel: eps_gather_packed.1
$region0: #{eps_gather_packed.1}
  #allocation0 [shape = 'u32[]', space=smem, size = 0x4, offset = 0x4, fixed_abs, tag = 'smem constant byte address 0x4 - core index']
  #allocation1 [shape = 'u32[144,128]{1,0:T(1,128)}', space=vmem, size = 0x12000, scoped, tag = 'internal scratch']
  #allocation2 [shape = 's32[1]{0}', space=sflag, size = 0x4, scoped, tag = 'scoped memory for eps_gather_packed.1']
  #allocation3 [shape = 's32[1]{0:T(128)S(6)}', space=smem, size = 0x200, scoped, tag = 'prefetched SMEM operand 0']
  %s0 = inlined_call_operand.<no memory space> [shape: s32[1], index: 0, kind: input, shape index: {}]
  %s1 = inlined_call_operand.vmem [shape: f32[4,1,128], index: 1, kind: input, shape index: {}]
  %s2 = inlined_call_operand.vmem [shape: f32[1,128], index: 2, kind: output, shape index: {}]
  %s3 = sld [smem:[#allocation0]]
  $region14: #{eps_gather_packed.1} parent=0
    _
  %s5 = ssub.s32 1, %s3
  %s6 = scalar_select 0, %s5, %s3
  %7 = sst [smem:[#allocation3]] %s0
  // Predicated region
  $region2: #{eps_gather_packed.1} parent=0 // pred_check
    _
  $region3: #{eps_gather_packed.1} parent=0 // pred_check_branch
    %9 = sbr.rel (0) target = $region5
  $region4: #{eps_gather_packed.1} parent=0 // pred_region
    _
  $region5: #{eps_gather_packed.1} parent=0 // pred_fallthru
    _
  %s10 = sld [smem:[#allocation3]]
  %s11 = scalar_lea.vmem %s1, %s10
  %v12 = vld [vmem:[%s11] sm:$0x1]
  %13 = vst [vmem:[%s2] sm:$0x1] %v12
  // Predicated region
  $region6: #{eps_gather_packed.1} parent=0 // pred_check
    _
  $region7: #{eps_gather_packed.1} parent=0 // pred_check_branch
    %15 = sbr.rel (0) target = $region9
  $region8: #{eps_gather_packed.1} parent=0 // pred_region
    _
  $region9: #{eps_gather_packed.1} parent=0 // pred_fallthru
    _
  // Predicated region
  $region10: #{eps_gather_packed.1} parent=0 // pred_check
    _
  $region11: #{eps_gather_packed.1} parent=0 // pred_check_branch
    %17 = sbr.rel (0) target = $region13
  $region12: #{eps_gather_packed.1} parent=0 // pred_region
    _
  $region13: #{eps_gather_packed.1} parent=0 // pred_fallthru
    _

</llo_original>
